<compile_context>
chip_gen: v5e
topology: v5e:2x2
jax: 0.10.0
libtpu: 0.0.40
codegen_flags: <defaults>
</compile_context>

<pallas_src>
import functools

import jax
import jax.numpy as jnp
import numpy as np
from jax.experimental import pallas as pl
from jax.experimental.pallas import tpu as pltpu

_LANE = 128   # vreg lane width
_SUB = 8      # f32 sublanes per vreg


def _loss_kernel(slab_ref, out_ref, *, s_tile, lane):
    """Accumulate squared pose error of one (5, s_tile, lane) slab block."""
    i = pl.program_id(1)   # reduction ("arbitrary") axis position

    # Each field slice is a dense (s_tile, lane) f32 slab -> full (8,128) vregs.
    est_x = slab_ref[0]
    est_y = slab_ref[1]
    est_t = slab_ref[2]
    theta = slab_ref[3]
    curv = slab_ref[4]

    # torch: target[target[:,1] == 0] = 1e-9 ; gt_theta is a view of col 0 so
    # it is overwritten too for those rows.
    zero = curv == 0.0
    theta = jnp.where(zero, jnp.float32(1e-9), theta)
    curv = jnp.where(zero, jnp.float32(1e-9), curv)

    # Exact divide (see header note on the 1e-9 sentinel path).
    radius = 1.0 / curv

    # Double-angle form of the reference math:
    #   rho*cos(phi) = r*sin(theta),  rho*sin(phi) = r*(1 - cos(theta)).
    st = jnp.sin(theta)
    ct = jnp.cos(theta)
    d_x = radius * st
    d_y = radius * (1.0 - ct)

    # x_y_th_weights = [1, 1, 1] -> multiplicative identity.
    contrib = (est_x - d_x) ** 2 + (est_y - d_y) ** 2 + (est_t - theta) ** 2

    # Fold the sublane-block axis so the resident accumulator stays a single
    # (8, lane) vreg. The reshape splits the second-minor dim on an 8-row tile
    # boundary (free relayout); the reduce is whole-vreg VALU adds.
    part = jnp.sum(contrib.reshape(s_tile // _SUB, _SUB, lane), axis=0)

    @pl.when(i == 0)
    def _init():
        out_ref[...] = jnp.zeros_like(out_ref)

    out_ref[...] += part[None, :, :]


def loss_final_pose_vs_cme_gt(estimate, target, *, block_rows=2048, n_cores=2):
    """estimate: [B, 3], target: [B, 2] -> scalar float32 loss (mean sq. error)."""
    B = estimate.shape[0]

    # --- tiling -------------------------------------------------------------
    rows = -(-B // _LANE)                               # sublane rows covering B
    rows_per_core = -(-rows // n_cores)
    s_tile = max(_SUB, min(int(block_rows), ((rows_per_core + _SUB - 1) // _SUB) * _SUB))
    s_tile = ((s_tile + _SUB - 1) // _SUB) * _SUB       # always a multiple of 8
    n_blk = -(-rows_per_core // s_tile)
    rows_per_core_pad = n_blk * s_tile
    s_total = n_cores * rows_per_core_pad
    b_pad = s_total * _LANE

    # --- pack AoS inputs into one lane+sublane dense slab: (5, s_total, 128) --
    # Rows: [est_x, est_y, est_theta, gt_theta, curvature]. Padding lanes get
    # curvature = 1.0 and zeros elsewhere -> their contribution is exactly 0,
    # so no mask row is needed and the global mean denominator stays 3*B.
    pad = b_pad - B
    est_t = jnp.transpose(estimate.astype(jnp.float32))            # (3, B)
    th = target[:, 0].astype(jnp.float32)[None, :]                 # (1, B)
    cv = target[:, 1].astype(jnp.float32)[None, :]                 # (1, B)
    est_p = jnp.pad(est_t, ((0, 0), (0, pad)))
    th_p = jnp.pad(th, ((0, 0), (0, pad)))
    cv_p = jnp.pad(cv, ((0, 0), (0, pad)), constant_values=1.0)
    slab = jnp.concatenate([est_p, th_p, cv_p], axis=0)            # (5, b_pad)
    slab = slab.reshape(5, s_total, _LANE)                         # (5, S, 128)

    block_bytes = 5 * s_tile * _LANE * 4
    vmem_bytes = int(2 * block_bytes + (4 << 20))   # double-buffered input + slack

    partials = pl.pallas_call(
        functools.partial(_loss_kernel, s_tile=s_tile, lane=_LANE),
        out_shape=jax.ShapeDtypeStruct((n_cores, _SUB, _LANE), jnp.float32),
        grid_spec=pltpu.PrefetchScalarGridSpec(
            num_scalar_prefetch=0,
            grid=(n_cores, n_blk),
            in_specs=[pl.BlockSpec((5, s_tile, _LANE),
                                   lambda c, i: (0, c * n_blk + i, 0))],
            # Output block is per-core resident across the "arbitrary" axis.
            out_specs=pl.BlockSpec((1, _SUB, _LANE), lambda c, i: (c, 0, 0)),
        ),
        compiler_params=pltpu.CompilerParams(
            dimension_semantics=("parallel", "arbitrary"),
            vmem_limit_bytes=vmem_bytes),
    )(slab)

    # Tiny final reduce of (n_cores, 8, 128) partials; global mean uses 3*B.
    inv_n = jnp.float32(1.0 / (3.0 * B))
    return jnp.sum(partials) * inv_n


def _reference(estimate, target):
    """Pure-JAX replica of the torch forward (including the in-place aliasing)."""
    theta = target[:, 0]
    curv = target[:, 1]
    mask = curv == 0.0
    theta = jnp.where(mask, 1e-9, theta)
    curv = jnp.where(mask, 1e-9, curv)
    radius = 1.0 / curv
    phi = theta / 2.0
    rho = 2.0 * radius * jnp.sin(phi)
    d_x = rho * jnp.cos(phi)
    d_y = rho * jnp.sin(phi)
    pose_target = jnp.stack([d_x, d_y, theta], axis=1)
    return jnp.mean((estimate - pose_target) ** 2)


if __name__ == "__main__":
    key = jax.random.PRNGKey(0)
    k1, k2, k3 = jax.random.split(key, 3)

    # Small test: single block per core, exercises the curvature==0 sentinel.
    B = 8
    estimate = jax.random.normal(k1, (B, 3), dtype=jnp.float32)
    theta = jax.random.uniform(k2, (B,), jnp.float32, minval=-0.5, maxval=0.5)
    curv = jax.random.uniform(k3, (B,), jnp.float32, minval=0.1, maxval=1.0)
    curv = curv.at[3].set(0.0)
    target = jnp.stack([theta, curv], axis=1)                      # [B, 2]

    loss = loss_final_pose_vs_cme_gt(estimate, target)
    jax.block_until_ready(loss)
    ref = _reference(estimate, target)
    assert np.allclose(np.asarray(loss), np.asarray(ref), rtol=1e-5, atol=1e-5), \
        (loss, ref)

    # Multi-block test: grid (2, 2) -> exercises the resident-accumulator path
    # across the "arbitrary" axis, both parallel-axis output blocks, and the
    # lane/sublane padding of the last block.
    B2 = 3000
    kk1, kk2, kk3 = jax.random.split(jax.random.PRNGKey(1), 3)
    est2 = jax.random.normal(kk1, (B2, 3), dtype=jnp.float32)
    th2 = jax.random.uniform(kk2, (B2,), jnp.float32, minval=-0.5, maxval=0.5)
    cv2 = jax.random.uniform(kk3, (B2,), jnp.float32, minval=0.1, maxval=1.0)
    cv2 = cv2.at[17].set(0.0)
    tgt2 = jnp.stack([th2, cv2], axis=1)
    loss2 = loss_final_pose_vs_cme_gt(est2, tgt2, block_rows=8)
    jax.block_until_ready(loss2)
    ref2 = _reference(est2, tgt2)
    assert np.allclose(np.asarray(loss2), np.asarray(ref2), rtol=1e-5, atol=1e-5), \
        (loss2, ref2)

    print("KERNEL_OK")
</pallas_src>

<mosaic_0001>
module attributes {stable_mosaic.version = 11 : i64} {
  func.func @_loss_kernel(%arg0: i32, %arg1: i32, %arg2: memref<5x8x128xf32, #tpu.memory_space<vmem>>, %arg3: memref<1x8x128xf32, #tpu.memory_space<vmem>>) attributes {dimension_semantics = [#tpu.dimension_semantics<parallel>, #tpu.dimension_semantics<arbitrary>], iteration_bounds = array<i64: 2, 1>, scalar_prefetch = 0 : i64, scratch_operands = 0 : i64, tpu.core_type = #tpu.core_type<tc>, window_params = [{transform_indices = @transform_0, window_bounds = array<i64: 5, 8, 128>}, {transform_indices = @transform_1, window_bounds = array<i64: 1, 8, 128>}]} {
    %c0 = arith.constant 0 : index
    %c0_0 = arith.constant 0 : index
    %c0_1 = arith.constant 0 : index
    %0 = vector.load %arg2[%c0, %c0_0, %c0_1] : memref<5x8x128xf32, #tpu.memory_space<vmem>>, vector<1x8x128xf32>
    %1 = vector.shape_cast %0 : vector<1x8x128xf32> to vector<8x128xf32>
    %c1 = arith.constant 1 : index
    %c0_2 = arith.constant 0 : index
    %c0_3 = arith.constant 0 : index
    %2 = vector.load %arg2[%c1, %c0_2, %c0_3] : memref<5x8x128xf32, #tpu.memory_space<vmem>>, vector<1x8x128xf32>
    %3 = vector.shape_cast %2 : vector<1x8x128xf32> to vector<8x128xf32>
    %c2 = arith.constant 2 : index
    %c0_4 = arith.constant 0 : index
    %c0_5 = arith.constant 0 : index
    %4 = vector.load %arg2[%c2, %c0_4, %c0_5] : memref<5x8x128xf32, #tpu.memory_space<vmem>>, vector<1x8x128xf32>
    %5 = vector.shape_cast %4 : vector<1x8x128xf32> to vector<8x128xf32>
    %c3 = arith.constant 3 : index
    %c0_6 = arith.constant 0 : index
    %c0_7 = arith.constant 0 : index
    %6 = vector.load %arg2[%c3, %c0_6, %c0_7] : memref<5x8x128xf32, #tpu.memory_space<vmem>>, vector<1x8x128xf32>
    %7 = vector.shape_cast %6 : vector<1x8x128xf32> to vector<8x128xf32>
    %c4 = arith.constant 4 : index
    %c0_8 = arith.constant 0 : index
    %c0_9 = arith.constant 0 : index
    %8 = vector.load %arg2[%c4, %c0_8, %c0_9] : memref<5x8x128xf32, #tpu.memory_space<vmem>>, vector<1x8x128xf32>
    %9 = vector.shape_cast %8 : vector<1x8x128xf32> to vector<8x128xf32>
    %cst = arith.constant 0.000000e+00 : f32
    %10 = vector.broadcast %cst : f32 to vector<8x128xf32>
    %11 = arith.cmpf oeq, %9, %10 : vector<8x128xf32>
    %cst_10 = arith.constant 9.99999971E-10 : f32
    %12 = vector.broadcast %cst_10 : f32 to vector<8x128xf32>
    %13 = arith.select %11, %12, %7 : vector<8x128xi1>, vector<8x128xf32>
    %cst_11 = arith.constant 9.99999971E-10 : f32
    %14 = vector.broadcast %cst_11 : f32 to vector<8x128xf32>
    %15 = arith.select %11, %14, %9 : vector<8x128xi1>, vector<8x128xf32>
    %cst_12 = arith.constant 1.000000e+00 : f32
    %16 = vector.broadcast %cst_12 : f32 to vector<8x128xf32>
    %17 = arith.divf %16, %15 : vector<8x128xf32>
    %18 = math.sin %13 : vector<8x128xf32>
    %19 = math.cos %13 : vector<8x128xf32>
    %20 = arith.mulf %17, %18 : vector<8x128xf32>
    %cst_13 = arith.constant 1.000000e+00 : f32
    %21 = vector.broadcast %cst_13 : f32 to vector<8x128xf32>
    %22 = arith.subf %21, %19 : vector<8x128xf32>
    %23 = arith.mulf %17, %22 : vector<8x128xf32>
    %24 = arith.subf %1, %20 : vector<8x128xf32>
    %25 = arith.mulf %24, %24 : vector<8x128xf32>
    %26 = arith.subf %3, %23 : vector<8x128xf32>
    %27 = arith.mulf %26, %26 : vector<8x128xf32>
    %28 = arith.addf %25, %27 : vector<8x128xf32>
    %29 = arith.subf %5, %13 : vector<8x128xf32>
    %30 = arith.mulf %29, %29 : vector<8x128xf32>
    %31 = arith.addf %28, %30 : vector<8x128xf32>
    %32 = vector.shape_cast %31 : vector<8x128xf32> to vector<1x8x128xf32>
    %cst_14 = arith.constant dense<0.000000e+00> : vector<8x128xf32>
    %33 = vector.multi_reduction <add>, %32, %cst_14 [0] : vector<1x8x128xf32> to vector<8x128xf32>
    %c0_i32 = arith.constant 0 : i32
    %34 = arith.cmpi eq, %arg1, %c0_i32 : i32
    %35 = arith.extui %34 : i1 to i32
    %c0_i32_15 = arith.constant 0 : i32
    %36 = arith.cmpi ne, %35, %c0_i32_15 : i32
    scf.if %36 {
      %cst_22 = arith.constant 0.000000e+00 : f32
      %41 = vector.broadcast %cst_22 : f32 to vector<1x8x128xf32>
      %c0_23 = arith.constant 0 : index
      %c0_24 = arith.constant 0 : index
      %c0_25 = arith.constant 0 : index
      %42 = vector.load %arg3[%c0_23, %c0_24, %c0_25] : memref<1x8x128xf32, #tpu.memory_space<vmem>>, vector<1x8x128xf32>
      tpu.vector_store %arg3[%c0_23, %c0_24, %c0_25], %41 {strides = array<i32>} : memref<1x8x128xf32, #tpu.memory_space<vmem>>, vector<1x8x128xf32>,
    } else {
    }
    %c0_16 = arith.constant 0 : index
    %c0_17 = arith.constant 0 : index
    %c0_18 = arith.constant 0 : index
    %37 = vector.load %arg3[%c0_16, %c0_17, %c0_18] : memref<1x8x128xf32, #tpu.memory_space<vmem>>, vector<1x8x128xf32>
    %38 = vector.shape_cast %33 : vector<8x128xf32> to vector<1x8x128xf32>
    %39 = arith.addf %37, %38 : vector<1x8x128xf32>
    %c0_19 = arith.constant 0 : index
    %c0_20 = arith.constant 0 : index
    %c0_21 = arith.constant 0 : index
    %40 = vector.load %arg3[%c0_19, %c0_20, %c0_21] : memref<1x8x128xf32, #tpu.memory_space<vmem>>, vector<1x8x128xf32>
    tpu.vector_store %arg3[%c0_19, %c0_20, %c0_21], %39 {strides = array<i32>} : memref<1x8x128xf32, #tpu.memory_space<vmem>>, vector<1x8x128xf32>,
    return
  }
  func.func @transform_0(%arg0: i32, %arg1: i32) -> (i32, i32, i32) {
    %c1_i32 = arith.constant 1 : i32
    %0 = arith.muli %arg0, %c1_i32 : i32
    %1 = arith.addi %0, %arg1 : i32
    %c0_i32 = arith.constant 0 : i32
    %c0_i32_0 = arith.constant 0 : i32
    %c0_i32_1 = arith.constant 0 : i32
    return %c0_i32, %1, %c0_i32_0 : i32, i32, i32
  }
  func.func @transform_1(%arg0: i32, %arg1: i32) -> (i32, i32, i32) {
    %c0_i32 = arith.constant 0 : i32
    %c0_i32_0 = arith.constant 0 : i32
    %c0_i32_1 = arith.constant 0 : i32
    return %arg0, %c0_i32, %c0_i32_0 : i32, i32, i32
  }
}

</mosaic_0001>

<llo_original>
// kernel: tpu_custom_call.1
$region0: #{tpu_custom_call.1}
  #allocation0 [shape = 'u32[]', space=smem, size = 0x4, offset = 0x4, fixed_abs, tag = 'smem constant byte address 0x4 - core index']
  #allocation1 [shape = 'u32[72,128]{1,0:T(1,128)}', space=vmem, size = 0x9000, scoped, tag = 'internal scratch']
  %s0 = inlined_call_operand.hbm [shape: f32[5,16,128], index: 0, kind: input, shape index: {}]
  %s1 = inlined_call_operand.hbm [shape: f32[2,8,128], index: 1, kind: output, shape index: {}]
  %s2 = sld [smem:[#allocation0]]
  $region45: #{tpu_custom_call.1} parent=0
    _
  %s4 = ssub.s32 1, %s2
  %s5 = scalar_select 0, %s4, %s2
  $region1: #{tpu_custom_call.1} parent=0
    #allocation2 [shape = 'u8[40960]{0}', space=vmem, size = 0xa000, scoped, tag = 'input window, operand 0']
    #allocation3 [shape = 's32[2]{0}', space=sflag, size = 0x8, scoped, tag = 'scoped memory for tpu_custom_call.1']
    #allocation4 [shape = 's32[2]{0}', space=sflag, size = 0x8, scoped, tag = 'scoped memory for tpu_custom_call.1']
    #allocation5 [shape = 'u8[8192]{0}', space=vmem, size = 0x2000, scoped, tag = 'output window, operand 0']
    %6 = vsyncpa [#allocation3], 0
    %s7 = scalar_lea.sflag [#allocation3], 1
    %8 = vsyncpa %s7, 0
    %9 = vsyncpa [#allocation4], 0
    %s10 = scalar_lea.sflag [#allocation4], 1
    %11 = vsyncpa %s10, 0
    loop: start=0, step=1, limit=4
    $region2: #{tpu_custom_call.1} parent=1 // loop_pre_header
      _
    $region3: #{tpu_custom_call.1} parent=1 // loop_header
      %s13 = sphi 0, %s17
      %p14 = scmp.ge.s32.totalorder %s13, 4
      %s20 = sphi 0, %s32
      %s21 = sphi 0, %s28
      %s22 = sphi 0, %s20
      %s23 = sphi 0, %s21
      %s24 = sphi 0, %s22
      %s25 = sphi 0, %s23
      %s37 = sphi 0, %s39
      %s40 = sphi 0, %s37
      %s41 = sphi 0, %s40
      %s57 = sphi 0, %s41
      %s63 = sphi 0, %s65
      %s66 = sphi 0, %s63
      %s67 = sphi 0, %s66
      %s83 = sphi 0, %s67
    $region4: #{tpu_custom_call.1} parent=1 // loop_header_branch
      %16 = sbr.rel (%p14) target = $region8
    $region5: #{tpu_custom_call.1} parent=1 // loop_body
      %s18 = ssub.s32 %s13, 1
      %s19 = ssub.s32 %s13, 2
      %s26 = sadd.s32 1, %s21
      %p27 = scmp.ge.s32.totalorder %s26, 1
      %s28 = scalar_select %p27, 0, %s26
      %s29 = sadd.s32 1, %s20
      %s30 = scalar_select %p27, %s29, %s20
      %p31 = scmp.ge.s32.totalorder %s30, 2
      %s32 = scalar_select %p31, 0, %s30
      %s33 = sadd.s32 %s20, %s21
      %s34 = sadd.s32 %s32, %s28
      %s35 = ssub.s32 %s33, %s34
      %p36 = scmp.eq.s32.totalorder %s35, 0
      %s38 = sadd.s32 %s37, 1
      %s39 = scalar_select %p36, %s37, %s38
      %p42 = pneg %p36
      %p43 = scmp.eq.s32.totalorder %s13, 1
      %p44 = por %p42, %p43
      %p45 = scmp.ne.s32.totalorder %s37, %s40
      %p46 = scmp.eq.s32.totalorder %s13, 0
      %p47 = por %p45, %p46
      %p48 = scmp.ne.s32.totalorder %s37, %s40
      %p49 = scmp.eq.s32.totalorder %s18, 1
      %p50 = por %p48, %p49
      %p51 = scmp.ne.s32.totalorder %s40, %s41
      %p52 = scmp.eq.s32.totalorder %s18, 0
      %p53 = por %p51, %p52
      %p54 = scmp.ne.s32.totalorder %s40, %s41
      %p55 = scmp.eq.s32.totalorder %s19, 1
      %p56 = por %p54, %p55
      %p58 = scmp.ne.s32.totalorder %s41, %s57
      %p59 = scmp.eq.s32.totalorder %s19, 0
      %p60 = por %p58, %p59
      %s61 = ssub.s32 %s20, %s32
      %p62 = scmp.eq.s32.totalorder %s61, 0
      %s64 = sadd.s32 %s63, 1
      %s65 = scalar_select %p62, %s63, %s64
      %p68 = pneg %p62
      %p69 = scmp.eq.s32.totalorder %s13, 1
      %p70 = por %p68, %p69
      %p71 = scmp.ne.s32.totalorder %s63, %s66
      %p72 = scmp.eq.s32.totalorder %s13, 0
      %p73 = por %p71, %p72
      %p74 = scmp.ne.s32.totalorder %s63, %s66
      %p75 = scmp.eq.s32.totalorder %s18, 1
      %p76 = por %p74, %p75
      %p77 = scmp.ne.s32.totalorder %s66, %s67
      %p78 = scmp.eq.s32.totalorder %s18, 0
      %p79 = por %p77, %p78
      %p80 = scmp.ne.s32.totalorder %s66, %s67
      %p81 = scmp.eq.s32.totalorder %s19, 1
      %p82 = por %p80, %p81
      %p84 = scmp.ne.s32.totalorder %s67, %s83
      %p85 = scmp.eq.s32.totalorder %s19, 0
      %p86 = por %p84, %p85
      %p87 = scmp.le.s32.totalorder 1, %s13
      %p88 = scmp.lt.s32.totalorder %s13, 3
      %p89 = pnand %p87, %p88
      %p90 = pneg %p89
      // Predicated region
      $region9: #{tpu_custom_call.1} parent=5 // pred_check
        _
      $region10: #{tpu_custom_call.1} parent=5 // pred_check_branch
        %92 = sbr.rel (%p89) target = $region12
      $region11: #{tpu_custom_call.1} parent=5 // pred_region
        %s93 = ssub.s32 %s13, 1
      $region12: #{tpu_custom_call.1} parent=5 // pred_fallthru
        _
      %p94 = scmp.lt.s32.totalorder %s13, 2
      // Predicated region
      $region13: #{tpu_custom_call.1} parent=5 // pred_check
        %p95 = pneg %p94
      $region14: #{tpu_custom_call.1} parent=5 // pred_check_branch
        %97 = sbr.rel (%p95) target = $region16
      $region15: #{tpu_custom_call.1} parent=5 // pred_region
        // Predicated region
        $region17: #{tpu_custom_call.1} parent=15 // pred_check
          %p98 = pneg %p47
        $region18: #{tpu_custom_call.1} parent=15 // pred_check_branch
          %100 = sbr.rel (%p98) target = $region20
        $region19: #{tpu_custom_call.1} parent=15 // pred_region
          %s101 = sand.u32 %s37, 1
          %s102 = scalar_lea.sflag [#allocation3], %s101
          %s103 = sand.u32 %s37, 1
          %s104 = smul.addr %s103, 40
          %s105 = scalar_lea.vmem [#allocation2], %s104
          %s106 = sadd.s32 %s20, %s21
          %108 = vsyncadd %s102, 0
          %s109 = smul.addr %s106, 8
          %s110 = scalar_lea.hbm %s0, %s109
          %s111 = sshll.u32 %s110, 4
          %s112 = int_to_ptr.hbm [resolvable:$true] %s111
          %s113 = sshll.u32 %s105, 4
          %s114 = int_to_ptr.vmem [resolvable:$true] %s113
          %119 = dma.hbm_to_vmem [thread:$0]  %s112, 640, %s114, %s102, 256, 128, 8
        $region20: #{tpu_custom_call.1} parent=15 // pred_fallthru
          _
      $region16: #{tpu_custom_call.1} parent=5 // pred_fallthru
        _
      %p120 = scmp.le.s32.totalorder 1, %s13
      %p121 = scmp.lt.s32.totalorder %s13, 3
      %p122 = pnand %p120, %p121
      %p123 = pneg %p122
      // Predicated region
      $region21: #{tpu_custom_call.1} parent=5 // pred_check
        _
      $region22: #{tpu_custom_call.1} parent=5 // pred_check_branch
        %125 = sbr.rel (%p122) target = $region24
      $region23: #{tpu_custom_call.1} parent=5 // pred_region
        %s126 = ssub.s32 %s13, 1
        %s127 = sand.u32 %s40, 1
        %s128 = scalar_lea.sflag [#allocation3], %s127
        %s129 = sand.u32 %s40, 1
        %s130 = smul.addr %s129, 40
        %s131 = scalar_lea.vmem [#allocation2], %s130
        // Predicated region
        $region25: #{tpu_custom_call.1} parent=23 // pred_check
          %p132 = pneg %p53
        $region26: #{tpu_custom_call.1} parent=23 // pred_check_branch
          %134 = sbr.rel (%p132) target = $region28
        $region27: #{tpu_custom_call.1} parent=23 // pred_region
          %136 = dma.done %s128, 640
        $region28: #{tpu_custom_call.1} parent=23 // pred_fallthru
          _
        %s137 = sand.u32 %s40, 1
        %s138 = scalar_lea.sflag [#allocation3], %s137
        %s139 = sand.u32 %s40, 1
        %s140 = smul.addr %s139, 40
        %s141 = scalar_lea.vmem [#allocation2], %s140
        %p142 = pneg %p53
        %p143 = pneg %p50
        %p144 = pneg %p79
        %p145 = pneg %p76
        %s146 = sand.u32 %s66, 1
        %s147 = scalar_lea.sflag [#allocation4], %s146
        %s148 = sand.u32 %s66, 1
        %s149 = smul.addr %s148, 8
        %s150 = scalar_lea.vmem [#allocation5], %s149
        %s151 = sadd.s32 %s22, %s23
        %v152 = vld [vmem:[%s131] sm:$0xff]
        %s153 = scalar_lea.vmem %s131, 8 [#allocation2]
        %v154 = vld [vmem:[%s153] sm:$0xff]
        %s155 = scalar_lea.vmem %s131, 16 [#allocation2]
        %v156 = vld [vmem:[%s155] sm:$0xff]
        %s157 = scalar_lea.vmem %s131, 24 [#allocation2]
        %v158 = vld [vmem:[%s157] sm:$0xff]
        %s159 = scalar_lea.vmem %s131, 32 [#allocation2]
        %v160 = vld [vmem:[%s159] sm:$0xff]
        %vm161 = vcmp.eq.f32.partialorder %v160, 0.0
        %v162 = vsel %vm161, 1e-09, %v158
        %v163 = vsel %vm161, 1e-09, %v160
        %v164 = vrcp.pop %v163
        %v165 = vmul.f32 %v163, %v164
        %v166 = vsub.f32 1.0, %v165
        %v167 = vmul.f32 %v164, %v166
        %v168 = vadd.f32 %v164, %v167
        %vm169 = vweird.f32 %v163
        %vm170 = vweird.f32 %v164
        %vm171 = vmor %vm169, %vm170
        %v172 = vsel %vm171, %v164, %v168
        %v173 = vand.u32 2147483647, %v163
        %vm174 = vcmp.eq.f32.partialorder %v173, 8.507059e+37
        %v175 = vand.u32 %v163, 2147483648
        %v176 = vor.u32 1.1754944e-38, %v175
        %v177 = vsel %vm174, %v176, %v172
        %v178 = vmul.f32 1.0, %v177
        %v179 = vand.u32 2147483647, %v162
        %vm180 = vcmp.le.f32.partialorder %v179, 0.7853982
        %vm181 = vcmp.lt.s32.totalorder %v162, 0
        %v182 = vand.u32 %v162, 2139095040
        %v183 = vshrl.u32 %v182, 23
        %v184 = vsub.s32 %v183, 127
        %v185 = vand.u32 2147483647, %v162
        %v186 = vand.u32 %v185, 8388607
        %v187 = vor.u32 %v186, 8388608
        %v188 = vsub.s32 0, %v187
        %v189 = vadd.s32 %v184, 1
        %vm190 = vcmp.gt.s32.totalorder %v189, 0
        %v191 = vsel %vm190, %v189, 0
        %v192 = vshrl.u32 %v191, 5
        %v193 = vand.u32 %v191, 31
        %v194 = vsub.s32 32, %v193
        %v195 = vshrl.u32 683565275, %v194
        %v196 = vshll.u32 683565275, %v193
        %v197 = vshrl.u32 2475754826, %v194
        %v198 = vor.u32 %v196, %v197
        %v199 = vshll.u32 2475754826, %v193
        %v200 = vshrl.u32 2131351028, %v194
        %v201 = vor.u32 %v199, %v200
        %v202 = vshll.u32 2131351028, %v193
        %v203 = vshrl.u32 2102212464, %v194
        %v204 = vor.u32 %v202, %v203
        %v205 = vshll.u32 2102212464, %v193
        %v206 = vshrl.u32 920167782, %v194
        %v207 = vor.u32 %v205, %v206
        %v208 = vshll.u32 920167782, %v193
        %v209 = vshrl.u32 1326507024, %v194
        %v210 = vor.u32 %v208, %v209
        %vm211 = vcmp.lt.s32.totalorder %v192, 1
        %vm212 = vcmp.lt.s32.totalorder %v192, 2
        %vm213 = vcmp.lt.s32.totalorder %v192, 3
        %vm214 = vcmp.lt.s32.totalorder %v192, 4
        %v215 = vsel %vm211, %v195, %v198
        %v216 = vsel %vm214, %v204, 2102212464
        %v217 = vsel %vm213, %v201, %v216
        %v218 = vsel %vm212, %v215, %v217
        %v219 = vsel %vm211, %v198, %v201
        %v220 = vsel %vm214, %v207, 920167782
        %v221 = vsel %vm213, %v204, %v220
        %v222 = vsel %vm212, %v219, %v221
        %v223 = vsel %vm211, %v201, %v204
        %v224 = vsel %vm214, %v210, 1326507024
        %v225 = vsel %vm213, %v207, %v224
        %v226 = vsel %vm212, %v223, %v225
        %v227 = vshll.u32 %v187, 8
        %v228 = vand.u32 %v227, 65535
        %v229 = vshrl.u32 %v227, 16
        %v230 = vand.u32 %v226, 65535
        %v231 = vshrl.u32 %v226, 16
        %v232 = vmul.u32 %v228, %v230
        %v233 = vmul.u32 %v228, %v231
        %v234 = vmul.u32 %v229, %v230
        %v235 = vmul.u32 %v229, %v231
        %v236 = vshll.u32 %v233, 16
        %v237 = vshrl.u32 %v233, 16
        %v238 = vshll.u32 %v234, 16
        %v239 = vshrl.u32 %v234, 16
        %vm240 = vc.u32 %v232, %v236
        %v241 = vsel %vm240, 1, 0
        %v242 = vadd.s32 %v232, %v236
        %v243 = vadd.s32 %v235, %v241
        %vm244 = vc.u32 %v242, %v238
        %v245 = vsel %vm244, 1, 0
        %v246 = vadd.s32 %v242, %v238
        %v247 = vadd.s32 %v243, %v245
        %v248 = vadd.s32 %v247, %v237
        %v249 = vadd.s32 %v248, %v239
        %v250 = vand.u32 %v227, 65535
        %v251 = vshrl.u32 %v227, 16
        %v252 = vand.u32 %v222, 65535
        %v253 = vshrl.u32 %v222, 16
        %v254 = vmul.u32 %v250, %v252
        %v255 = vmul.u32 %v250, %v253
        %v256 = vmul.u32 %v251, %v252
        %v257 = vmul.u32 %v251, %v253
        %v258 = vshll.u32 %v255, 16
        %v259 = vshrl.u32 %v255, 16
        %v260 = vshll.u32 %v256, 16
        %v261 = vshrl.u32 %v256, 16
        %vm262 = vc.u32 %v254, %v258
        %v263 = vsel %vm262, 1, 0
        %v264 = vadd.s32 %v254, %v258
        %v265 = vadd.s32 %v257, %v263
        %vm266 = vc.u32 %v264, %v260
        %v267 = vsel %vm266, 1, 0
        %v268 = vadd.s32 %v264, %v260
        %v269 = vadd.s32 %v265, %v267
        %v270 = vadd.s32 %v269, %v259
        %v271 = vadd.s32 %v270, %v261
        %v272 = vmul.u32 %v227, %v218
        %v273 = vadd.s32 %v249, %v268
        %vm274 = vc.u32 %v249, %v268
        %v275 = vadd.s32 %v271, 1
        %v276 = vsel %vm274, %v275, %v271
        %v277 = vadd.s32 %v272, %v276
        %v278 = vadd.s32 %v277, 536870912
        %v279 = vshrl.u32 %v278, 30
        %v280 = vshll.u32 %v279, 30
        %v281 = vsub.s32 %v277, %v280
        %vm282 = vcmp.lt.s32.totalorder %v281, 0
        %v283 = vsub.s32 0, %v281
        %v284 = vsel %vm282, %v283, %v281
        %v285 = vclz %v284
        %v286 = vsub.s32 %v285, 2
        %vm287 = vcmp.gt.s32.totalorder 0, %v286
        %v288 = vsel %vm287, 0, %v286
        %v289 = vsub.s32 32, %v288
        %v290 = vshll.u32 %v281, %v288
        %v291 = vshrl.u32 %v273, %v289
        %v292 = vor.u32 %v290, %v291
        %v293 = vsub.s32 4294967266, %v288
        %v294 = vadd.s32 %v293, 127
        %v295 = vshll.u32 %v294, 23
        %v296 = vor.u32 4788187, %v295
        %v297 = vand.u32 2147483647, %v296
        %v299 = vcvt.s32.f32 %v292
        %v300 = vmul.f32 %v299, %v297
        %v301 = vxor.u32 %v300, 2147483648
        %v302 = vsel %vm181, %v301, %v300
        %v303 = vsub.s32 4, %v279
        %v304 = vsel %vm181, %v303, %v279
        %v305 = vsel %vm180, %v162, %v302
        %v306 = vsel %vm180, 0, %v304
        %v307 = vmul.f32 %v305, %v305
        %v308 = vmul.f32 %v307, -0.001358992
        %v309 = vadd.f32 %v308, 0.041655596
        %v310 = vmul.f32 %v307, %v309
        %v311 = vadd.f32 %v310, -0.4999988
        %v312 = vmul.f32 %v307, %v311
        %v313 = vadd.f32 1.0, %v312
        %v314 = vmul.f32 %v305, %v305
        %v315 = vmul.f32 %v314, -0.00019511016
        %v316 = vadd.f32 %v315, 0.008332121
        %v317 = vmul.f32 %v314, %v316
        %v318 = vadd.f32 %v317, -0.16666654
        %v319 = vmul.f32 %v314, %v318
        %v320 = vadd.f32 %v319, 1.0
        %v321 = vmul.f32 %v320, %v305
        %vm322 = vweird.f32 %v162
        %v323 = vadd.s32 %v306, 3
        %v324 = vand.u32 %v323, 3
        %vm325 = vcmp.lt.s32.totalorder %v324, 2
        %vm326 = vcmp.eq.s32.totalorder %v324, 0
        %v327 = vxor.u32 %v321, 2147483648
        %v328 = vsel %vm326, %v313, %v327
        %vm329 = vcmp.eq.s32.totalorder %v324, 2
        %v330 = vxor.u32 %v313, 2147483648
        %v331 = vsel %vm329, %v330, %v321
        %v332 = vsel %vm325, %v328, %v331
        %v333 = vsel %vm322, nan, %v332
        %v334 = vand.u32 2147483647, %v162
        %vm335 = vcmp.le.f32.partialorder %v334, 0.7853982
        %vm336 = vcmp.lt.s32.totalorder %v162, 0
        %v337 = vand.u32 %v162, 2139095040
        %v338 = vshrl.u32 %v337, 23
        %v339 = vsub.s32 %v338, 127
        %v340 = vand.u32 2147483647, %v162
        %v341 = vand.u32 %v340, 8388607
        %v342 = vor.u32 %v341, 8388608
        %v343 = vsub.s32 0, %v342
        %v344 = vadd.s32 %v339, 1
        %vm345 = vcmp.gt.s32.totalorder %v344, 0
        %v346 = vsel %vm345, %v344, 0
        %v347 = vshrl.u32 %v346, 5
        %v348 = vand.u32 %v346, 31
        %v349 = vsub.s32 32, %v348
        %v350 = vshrl.u32 683565275, %v349
        %v351 = vshll.u32 683565275, %v348
        %v352 = vshrl.u32 2475754826, %v349
        %v353 = vor.u32 %v351, %v352
        %v354 = vshll.u32 2475754826, %v348
        %v355 = vshrl.u32 2131351028, %v349
        %v356 = vor.u32 %v354, %v355
        %v357 = vshll.u32 2131351028, %v348
        %v358 = vshrl.u32 2102212464, %v349
        %v359 = vor.u32 %v357, %v358
        %v360 = vshll.u32 2102212464, %v348
        %v361 = vshrl.u32 920167782, %v349
        %v362 = vor.u32 %v360, %v361
        %v363 = vshll.u32 920167782, %v348
        %v364 = vshrl.u32 1326507024, %v349
        %v365 = vor.u32 %v363, %v364
        %vm366 = vcmp.lt.s32.totalorder %v347, 1
        %vm367 = vcmp.lt.s32.totalorder %v347, 2
        %vm368 = vcmp.lt.s32.totalorder %v347, 3
        %vm369 = vcmp.lt.s32.totalorder %v347, 4
        %v370 = vsel %vm366, %v350, %v353
        %v371 = vsel %vm369, %v359, 2102212464
        %v372 = vsel %vm368, %v356, %v371
        %v373 = vsel %vm367, %v370, %v372
        %v374 = vsel %vm366, %v353, %v356
        %v375 = vsel %vm369, %v362, 920167782
        %v376 = vsel %vm368, %v359, %v375
        %v377 = vsel %vm367, %v374, %v376
        %v378 = vsel %vm366, %v356, %v359
        %v379 = vsel %vm369, %v365, 1326507024
        %v380 = vsel %vm368, %v362, %v379
        %v381 = vsel %vm367, %v378, %v380
        %v382 = vshll.u32 %v342, 8
        %v383 = vand.u32 %v382, 65535
        %v384 = vshrl.u32 %v382, 16
        %v385 = vand.u32 %v381, 65535
        %v386 = vshrl.u32 %v381, 16
        %v387 = vmul.u32 %v383, %v385
        %v388 = vmul.u32 %v383, %v386
        %v389 = vmul.u32 %v384, %v385
        %v390 = vmul.u32 %v384, %v386
        %v391 = vshll.u32 %v388, 16
        %v392 = vshrl.u32 %v388, 16
        %v393 = vshll.u32 %v389, 16
        %v394 = vshrl.u32 %v389, 16
        %vm395 = vc.u32 %v387, %v391
        %v396 = vsel %vm395, 1, 0
        %v397 = vadd.s32 %v387, %v391
        %v398 = vadd.s32 %v390, %v396
        %vm399 = vc.u32 %v397, %v393
        %v400 = vsel %vm399, 1, 0
        %v401 = vadd.s32 %v397, %v393
        %v402 = vadd.s32 %v398, %v400
        %v403 = vadd.s32 %v402, %v392
        %v404 = vadd.s32 %v403, %v394
        %v405 = vand.u32 %v382, 65535
        %v406 = vshrl.u32 %v382, 16
        %v407 = vand.u32 %v377, 65535
        %v408 = vshrl.u32 %v377, 16
        %v409 = vmul.u32 %v405, %v407
        %v410 = vmul.u32 %v405, %v408
        %v411 = vmul.u32 %v406, %v407
        %v412 = vmul.u32 %v406, %v408
        %v413 = vshll.u32 %v410, 16
        %v414 = vshrl.u32 %v410, 16
        %v415 = vshll.u32 %v411, 16
        %v416 = vshrl.u32 %v411, 16
        %vm417 = vc.u32 %v409, %v413
        %v418 = vsel %vm417, 1, 0
        %v419 = vadd.s32 %v409, %v413
        %v420 = vadd.s32 %v412, %v418
        %vm421 = vc.u32 %v419, %v415
        %v422 = vsel %vm421, 1, 0
        %v423 = vadd.s32 %v419, %v415
        %v424 = vadd.s32 %v420, %v422
        %v425 = vadd.s32 %v424, %v414
        %v426 = vadd.s32 %v425, %v416
        %v427 = vmul.u32 %v382, %v373
        %v428 = vadd.s32 %v404, %v423
        %vm429 = vc.u32 %v404, %v423
        %v430 = vadd.s32 %v426, 1
        %v431 = vsel %vm429, %v430, %v426
        %v432 = vadd.s32 %v427, %v431
        %v433 = vadd.s32 %v432, 536870912
        %v434 = vshrl.u32 %v433, 30
        %v435 = vshll.u32 %v434, 30
        %v436 = vsub.s32 %v432, %v435
        %vm437 = vcmp.lt.s32.totalorder %v436, 0
        %v438 = vsub.s32 0, %v436
        %v439 = vsel %vm437, %v438, %v436
        %v440 = vclz %v439
        %v441 = vsub.s32 %v440, 2
        %vm442 = vcmp.gt.s32.totalorder 0, %v441
        %v443 = vsel %vm442, 0, %v441
        %v444 = vsub.s32 32, %v443
        %v445 = vshll.u32 %v436, %v443
        %v446 = vshrl.u32 %v428, %v444
        %v447 = vor.u32 %v445, %v446
        %v448 = vsub.s32 4294967266, %v443
        %v449 = vadd.s32 %v448, 127
        %v450 = vshll.u32 %v449, 23
        %v451 = vor.u32 4788187, %v450
        %v452 = vand.u32 2147483647, %v451
        %v454 = vcvt.s32.f32 %v447
        %v455 = vmul.f32 %v454, %v452
        %v456 = vxor.u32 %v455, 2147483648
        %v457 = vsel %vm336, %v456, %v455
        %v458 = vsub.s32 4, %v434
        %v459 = vsel %vm336, %v458, %v434
        %v460 = vsel %vm335, %v162, %v457
        %v461 = vsel %vm335, 0, %v459
        %v462 = vmul.f32 %v460, %v460
        %v463 = vmul.f32 %v462, -0.001358992
        %v464 = vadd.f32 %v463, 0.041655596
        %v465 = vmul.f32 %v462, %v464
        %v466 = vadd.f32 %v465, -0.4999988
        %v467 = vmul.f32 %v462, %v466
        %v468 = vadd.f32 1.0, %v467
        %v469 = vmul.f32 %v460, %v460
        %v470 = vmul.f32 %v469, -0.00019511016
        %v471 = vadd.f32 %v470, 0.008332121
        %v472 = vmul.f32 %v469, %v471
        %v473 = vadd.f32 %v472, -0.16666654
        %v474 = vmul.f32 %v469, %v473
        %v475 = vadd.f32 %v474, 1.0
        %v476 = vmul.f32 %v475, %v460
        %vm477 = vweird.f32 %v162
        %v478 = vand.u32 %v461, 3
        %vm479 = vcmp.lt.s32.totalorder %v478, 2
        %vm480 = vcmp.eq.s32.totalorder %v478, 0
        %v481 = vxor.u32 %v476, 2147483648
        %v482 = vsel %vm480, %v468, %v481
        %vm483 = vcmp.eq.s32.totalorder %v478, 2
        %v484 = vxor.u32 %v468, 2147483648
        %v485 = vsel %vm483, %v484, %v476
        %v486 = vsel %vm479, %v482, %v485
        %v487 = vsel %vm477, nan, %v486
        %v488 = vmul.f32 %v178, %v333
        %v489 = vsub.f32 1.0, %v487
        %v490 = vmul.f32 %v178, %v489
        %v491 = vsub.f32 %v152, %v488
        %v492 = vmul.f32 %v491, %v491
        %v493 = vsub.f32 %v154, %v490
        %v494 = vmul.f32 %v493, %v493
        %v495 = vadd.f32 %v492, %v494
        %v496 = vsub.f32 %v156, %v162
        %v497 = vmul.f32 %v496, %v496
        %v498 = vadd.f32 %v495, %v497
        %v499 = vadd.f32 %v498, 0.0
        %p500 = scmp.eq.s32.totalorder %s23, 0
        // Predicated region
        $region29: #{tpu_custom_call.1} parent=23 // pred_check
          %p501 = pneg %p500
        $region30: #{tpu_custom_call.1} parent=23 // pred_check_branch
          %503 = sbr.rel (%p501) target = $region32
        $region31: #{tpu_custom_call.1} parent=23 // pred_region
          %504 = vst [vmem:[%s150] sm:$0xff] 0.0
        $region32: #{tpu_custom_call.1} parent=23 // pred_fallthru
          _
        %v505 = vld [vmem:[%s150] sm:$0xff]
        %v506 = vadd.f32 %v505, %v499
        %507 = vst [vmem:[%s150] sm:$0xff] %v506
        %s508 = sand.u32 %s66, 1
        %s509 = scalar_lea.sflag [#allocation4], %s508
        %s510 = sand.u32 %s66, 1
        %s511 = smul.addr %s510, 8
        %s512 = scalar_lea.vmem [#allocation5], %s511
        // Predicated region
        $region33: #{tpu_custom_call.1} parent=23 // pred_check
          %p513 = pneg %p76
        $region34: #{tpu_custom_call.1} parent=23 // pred_check_branch
          %515 = sbr.rel (%p513) target = $region36
        $region35: #{tpu_custom_call.1} parent=23 // pred_region
          %517 = vsyncadd %s509, 0
          %s518 = smul.addr %s22, 8
          %s519 = scalar_lea.hbm %s1, %s518
          %s521 = sshll.u32 %s512, 4
          %s522 = int_to_ptr.vmem [resolvable:$true] %s521
          %s523 = sshll.u32 %s519, 4
          %s524 = int_to_ptr.hbm [resolvable:$true] %s523
          %526 = dma.vmem_to_hbm [thread:$0]  %s522, 128, %s524, %s509
        $region36: #{tpu_custom_call.1} parent=23 // pred_fallthru
          _
      $region24: #{tpu_custom_call.1} parent=5 // pred_fallthru
        _
      %p527 = scmp.le.s32.totalorder 2, %s13
      // Predicated region
      $region37: #{tpu_custom_call.1} parent=5 // pred_check
        %p528 = pneg %p527
      $region38: #{tpu_custom_call.1} parent=5 // pred_check_branch
        %530 = sbr.rel (%p528) target = $region40
      $region39: #{tpu_custom_call.1} parent=5 // pred_region
        %s531 = ssub.s32 %s13, 2
        // Predicated region
        $region41: #{tpu_custom_call.1} parent=39 // pred_check
          %p532 = pneg %p82
        $region42: #{tpu_custom_call.1} parent=39 // pred_check_branch
          %534 = sbr.rel (%p532) target = $region44
        $region43: #{tpu_custom_call.1} parent=39 // pred_region
          %s535 = sand.u32 %s67, 1
          %s536 = scalar_lea.sflag [#allocation4], %s535
          %s537 = sand.u32 %s67, 1
          %s538 = smul.addr %s537, 8
          %s539 = scalar_lea.vmem [#allocation5], %s538
          %541 = dma.done %s536, 128
        $region44: #{tpu_custom_call.1} parent=39 // pred_fallthru
          _
      $region40: #{tpu_custom_call.1} parent=5 // pred_fallthru
        _
    $region6: #{tpu_custom_call.1} parent=1 // loop_footer
      %s17 = sadd.s32 1, %s13
    $region7: #{tpu_custom_call.1} parent=1 // loop_footer_branch
      %12 = sbr.rel target = $region3
    $region8: #{tpu_custom_call.1} parent=1 // loop_exit
      _
    %542 = vsyncpa [#allocation3], 1
    %s543 = scalar_lea.sflag [#allocation3], 1
    %544 = vsyncpa %s543, 1
    %545 = vsyncpa [#allocation4], 1
    %s546 = scalar_lea.sflag [#allocation4], 1
    %547 = vsyncpa %s546, 1

</llo_original>
